<compile_context>
chip_gen: v5e
topology: v5e:2x2
jax: 0.10.0
libtpu: 0.0.40
codegen_flags: <defaults>
</compile_context>

<pallas_src>
import math

import jax
import jax.numpy as jnp
from jax.experimental import pallas as pl
from jax.experimental.pallas import tpu as pltpu

STATE_SIZE = 16          # FrozenLake 4x4 -> one-hot of 16
ACTION_SIZE = 4
HIDDEN_SIZES = (64, 64)

LANE = 128               # TPU lane width (slab column padding)
OUT_PAD = 8              # output lanes actually written (>= ACTION_SIZE)
MAX_BLOCK = 256          # cap batch block to keep vreg pressure / spills in check

# Row layout of the packed bf16 weight slab (144 rows x 128 cols, zero padded):
#   rows [0, 16)    : T1 = relu(w1 + b1)   (16 x 64)  in cols 0:64   (bias/ReLU folded)
#   rows [16, 80)   : w2                   (64 x 64)  in cols 0:64
#   rows [80, 144)  : w3                   (64 x 4)   in cols 0:4
# All row starts are multiples of 16 -> aligned bf16 sublane tiles.
_T1_R0, _T1_R1 = 0, STATE_SIZE
_W2_R0, _W2_R1 = _T1_R1, _T1_R1 + HIDDEN_SIZES[0]
_W3_R0, _W3_R1 = _W2_R1, _W2_R1 + HIDDEN_SIZES[1]
W_SLAB_ROWS = _W3_R1                     # 144
B_SLAB_ROWS = 8                          # row 0 = b2, row 1 = b3, rest zero (f32)


def _qnetwork_kernel(ids_ref, w_ref, b_ref, o_ref):
    blk = ids_ref.shape[0]
    h1, h2 = HIDDEN_SIZES

    # Rebuild the one-hot input in-register from the integer state ids (VPU only).
    ids = ids_ref[...]                                              # (blk, 1) int32
    col = jax.lax.broadcasted_iota(jnp.int32, (blk, STATE_SIZE), 1)
    x = jnp.where(col == ids, 1.0, 0.0).astype(jnp.bfloat16)        # (blk, 16) one-hot

    # Static, tile-aligned slices of the packed slabs.
    t1 = w_ref[_T1_R0:_T1_R1, 0:h1]          # (16, 64) bf16 = relu(w1 + b1)
    w2 = w_ref[_W2_R0:_W2_R1, 0:h2]          # (64, 64) bf16
    w3 = w_ref[_W3_R0:_W3_R1, 0:OUT_PAD]     # (64, 8)  bf16 (cols 4:8 are zero)
    b2 = b_ref[0:1, 0:h2]                    # (1, 64)  f32
    b3 = b_ref[1:2, 0:OUT_PAD]               # (1, 8)   f32 (cols 4:8 are zero)

    # Layer 1: bias + ReLU were folded into t1 at pack time (exact for a strict one-hot),
    # so this is a bare matmul selecting the id-th row of t1 (f32 accumulation is exact).
    h = jnp.dot(x, t1, preferred_element_type=jnp.float32)          # (blk, 64) f32
    # Layer 2: Linear + ReLU (bf16 MXU operands, f32 epilogue -- keep f32 for v5e VPU).
    h = jnp.dot(h.astype(jnp.bfloat16), w2, preferred_element_type=jnp.float32) + b2
    h = jnp.maximum(h, 0.0)
    # Output layer: (blk, 8) tile; lanes ACTION_SIZE:8 stay zero (w3/b3 zero padded).
    q = jnp.dot(h.astype(jnp.bfloat16), w3, preferred_element_type=jnp.float32) + b3
    o_ref[...] = q.astype(o_ref.dtype)


def _pick_block(batch):
    """Batch-block size: big enough to amortize per-step overhead, small enough that
    batch<=128 still yields a 2-step grid (both v7x TensorCores busy) and vregs don't spill."""
    if batch >= 512:
        return MAX_BLOCK
    if batch >= 128:
        return 128
    return 64


def qnetwork_forward(state_ids, packed):
    """Q-values for integer FrozenLake states.

    state_ids: (batch,) integer states in [0, STATE_SIZE). Equivalent to the PyTorch
               forward on one_hot(state_ids, STATE_SIZE).
    packed:    output of pack_params().
    Returns (batch, ACTION_SIZE) float32 Q-values.
    """
    w_slab, b_slab = packed["w"], packed["b"]
    batch = state_ids.shape[0]

    block = _pick_block(batch)
    steps = max(pl.cdiv(batch, block), 2)    # >= 2 so the 'parallel' axis spans both v7x TCs
    steps += steps % 2                       # even grid -> balanced megacore split
    padded = steps * block

    ids = state_ids.astype(jnp.int32).reshape(batch, 1)
    if padded != batch:
        ids = jnp.pad(ids, ((0, padded - batch), (0, 0)))           # pad rows eval state 0

    out = pl.pallas_call(
        _qnetwork_kernel,
        out_shape=jax.ShapeDtypeStruct((padded, OUT_PAD), jnp.float32),
        grid=(steps,),
        in_specs=[
            pl.BlockSpec((block, 1), lambda i: (i, 0)),              # state ids
            pl.BlockSpec(w_slab.shape, lambda i: (0, 0)),            # packed weights (resident)
            pl.BlockSpec(b_slab.shape, lambda i: (0, 0)),            # packed biases (resident)
        ],
        out_specs=pl.BlockSpec((block, OUT_PAD), lambda i: (i, 0)),
        compiler_params=pltpu.CompilerParams(
            dimension_semantics=("parallel",),                       # shard batch across TCs
        ),
    )(ids, w_slab, b_slab)
    return out[:batch, :ACTION_SIZE]


def qnetwork_forward_onehot(x_onehot, packed):
    """Convenience wrapper matching the PyTorch signature (strictly one-hot rows only)."""
    return qnetwork_forward(jnp.argmax(x_onehot, axis=-1), packed)


def precompute_q_table(params):
    """If weights are frozen across many calls (rollout / target network), the whole
    network is a (16, 4) lookup: compute it once in plain XLA and gather instead of
    calling the kernel.  Not for the inner training step (weights just changed)."""
    return _reference_forward(jnp.arange(STATE_SIZE), params)


def _xavier_uniform(key, fan_in, fan_out):
    # Matches nn.init.xavier_uniform_ (gain=1.0): U(-a, a), a = sqrt(6/(fan_in+fan_out)).
    # Stored as (in, out) so the math is y = x @ W + b (== PyTorch x @ W_pt.T + b).
    bound = math.sqrt(6.0 / (fan_in + fan_out))
    return jax.random.uniform(
        key, (fan_in, fan_out), dtype=jnp.float32, minval=-bound, maxval=bound
    )


def init_qnetwork_params(key):
    """Raw f32 parameters, same init as the PyTorch module."""
    k1, k2, k3 = jax.random.split(key, 3)
    h1, h2 = HIDDEN_SIZES
    return {
        "w1": _xavier_uniform(k1, STATE_SIZE, h1),
        "b1": jnp.zeros((h1,), jnp.float32),      # nn.init.constant_(bias, 0.0)
        "w2": _xavier_uniform(k2, h1, h2),
        "b2": jnp.zeros((h2,), jnp.float32),
        "w3": _xavier_uniform(k3, h2, ACTION_SIZE),
        "b3": jnp.zeros((ACTION_SIZE,), jnp.float32),
    }


def pack_params(params):
    """Pack weights into one bf16 (144,128) slab and biases into one f32 (8,128) slab.
    Layer-1 bias + ReLU are folded into the w1 rows (exact for strict one-hot inputs;
    do NOT reuse this slab for a generic dense-input path)."""
    h1, h2 = HIDDEN_SIZES
    assert h1 <= LANE and h2 <= LANE and ACTION_SIZE <= OUT_PAD <= LANE

    t1 = jnp.maximum(params["w1"] + params["b1"][None, :], 0.0)      # (16, 64) f32

    w_slab = jnp.zeros((W_SLAB_ROWS, LANE), jnp.bfloat16)
    w_slab = w_slab.at[_T1_R0:_T1_R0 + STATE_SIZE, 0:h1].set(t1.astype(jnp.bfloat16))
    w_slab = w_slab.at[_W2_R0:_W2_R0 + h1, 0:h2].set(params["w2"].astype(jnp.bfloat16))
    w_slab = w_slab.at[_W3_R0:_W3_R0 + h2, 0:ACTION_SIZE].set(
        params["w3"].astype(jnp.bfloat16))

    b_slab = jnp.zeros((B_SLAB_ROWS, LANE), jnp.float32)
    b_slab = b_slab.at[0, 0:h2].set(params["b2"])
    b_slab = b_slab.at[1, 0:ACTION_SIZE].set(params["b3"])

    return {"w": w_slab, "b": b_slab}


def _reference_forward(state_ids, params):
    """Plain-JAX reference mimicking the kernel numerics (bf16 MXU operands, f32 acc,
    layer-1 bias/ReLU folded before the bf16 cast)."""
    bf = jnp.bfloat16
    t1 = jnp.maximum(params["w1"] + params["b1"][None, :], 0.0).astype(bf)   # (16, 64)
    h = t1[state_ids].astype(jnp.float32)          # exact one-hot "matmul" == row gather
    h = jnp.dot(h.astype(bf), params["w2"].astype(bf),
                preferred_element_type=jnp.float32) + params["b2"]
    h = jnp.maximum(h, 0.0)
    q = jnp.dot(h.astype(bf), params["w3"].astype(bf),
                preferred_element_type=jnp.float32) + params["b3"]
    return q


if __name__ == "__main__":
    key = jax.random.PRNGKey(0)
    pkey, skey = jax.random.split(key)

    params = init_qnetwork_params(pkey)
    packed = pack_params(params)

    # Batch of 128 FrozenLake states -> block 64, 2-step parallel grid.
    batch = 128
    state_ids = jax.random.randint(skey, (batch,), 0, STATE_SIZE)

    q_values = qnetwork_forward(state_ids, packed)
    q_values = jax.block_until_ready(q_values)

    ref = _reference_forward(state_ids, params)
    assert q_values.shape == (batch, ACTION_SIZE)
    err = float(jnp.max(jnp.abs(q_values - ref)))
    assert jnp.allclose(q_values, ref, atol=1e-4, rtol=1e-4), f"max abs err = {err}"

    print("KERNEL_OK")
</pallas_src>

<mosaic_0001>
module attributes {stable_mosaic.version = 11 : i64} {
  func.func @_qnetwork_kernel(%arg0: i32, %arg1: memref<128x1xi32, #tpu.memory_space<vmem>>, %arg2: memref<144x128xbf16, #tpu.memory_space<vmem>>, %arg3: memref<8x128xf32, #tpu.memory_space<vmem>>, %arg4: memref<128x8xf32, #tpu.memory_space<vmem>>) attributes {dimension_semantics = [#tpu.dimension_semantics<parallel>], iteration_bounds = array<i64: 2>, scalar_prefetch = 0 : i64, scratch_operands = 0 : i64, tpu.core_type = #tpu.core_type<tc>, window_params = [{transform_indices = @transform_0, window_bounds = array<i64: 128, 1>}, {pipeline_mode = #tpu.pipeline_mode<synchronous>, transform_indices = @transform_1, window_bounds = array<i64: 144, 128>}, {pipeline_mode = #tpu.pipeline_mode<synchronous>, transform_indices = @transform_2, window_bounds = array<i64: 8, 128>}, {transform_indices = @transform_3, window_bounds = array<i64: 128, 8>}]} {
    %c0 = arith.constant 0 : index
    %c0_0 = arith.constant 0 : index
    %0 = vector.load %arg1[%c0, %c0_0] : memref<128x1xi32, #tpu.memory_space<vmem>>, vector<128x1xi32>
    %1 = tpu.iota {dimensions = array<i32: 1>} : vector<128x16xi32>
    %2 = vector.broadcast %0 : vector<128x1xi32> to vector<128x16xi32>
    %3 = arith.cmpi eq, %1, %2 : vector<128x16xi32>
    %cst = arith.constant 1.000000e+00 : f32
    %cst_1 = arith.constant 0.000000e+00 : f32
    %4 = vector.broadcast %cst : f32 to vector<128x16xf32>
    %5 = vector.broadcast %cst_1 : f32 to vector<128x16xf32>
    %6 = arith.select %3, %4, %5 : vector<128x16xi1>, vector<128x16xf32>
    %7 = arith.truncf %6 : vector<128x16xf32> to vector<128x16xbf16>
    %c0_2 = arith.constant 0 : index
    %c0_3 = arith.constant 0 : index
    %8 = vector.load %arg2[%c0_2, %c0_3] : memref<144x128xbf16, #tpu.memory_space<vmem>>, vector<16x64xbf16>
    %c16 = arith.constant 16 : index
    %c0_4 = arith.constant 0 : index
    %9 = vector.load %arg2[%c16, %c0_4] : memref<144x128xbf16, #tpu.memory_space<vmem>>, vector<64x64xbf16>
    %c80 = arith.constant 80 : index
    %c0_5 = arith.constant 0 : index
    %10 = vector.load %arg2[%c80, %c0_5] : memref<144x128xbf16, #tpu.memory_space<vmem>>, vector<64x8xbf16>
    %c0_6 = arith.constant 0 : index
    %c0_7 = arith.constant 0 : index
    %11 = vector.load %arg3[%c0_6, %c0_7] : memref<8x128xf32, #tpu.memory_space<vmem>>, vector<1x64xf32>
    %c1 = arith.constant 1 : index
    %c0_8 = arith.constant 0 : index
    %12 = vector.load %arg3[%c1, %c0_8] : memref<8x128xf32, #tpu.memory_space<vmem>>, vector<1x8xf32>
    %cst_9 = arith.constant dense<0.000000e+00> : vector<128x64xf32>
    %13 = tpu.matmul %7, %8, %cst_9 {dimension_numbers = #tpu.dot_dimension_numbers<[1], [0], [0], [1], [0, 0, 1, 1], [], []>} : vector<128x16xbf16>, vector<16x64xbf16>, vector<128x64xf32> -> vector<128x64xf32>
    %14 = arith.truncf %13 : vector<128x64xf32> to vector<128x64xbf16>
    %cst_10 = arith.constant dense<0.000000e+00> : vector<128x64xf32>
    %15 = tpu.matmul %14, %9, %cst_10 {dimension_numbers = #tpu.dot_dimension_numbers<[1], [0], [0], [1], [0, 0, 1, 1], [], []>} : vector<128x64xbf16>, vector<64x64xbf16>, vector<128x64xf32> -> vector<128x64xf32>
    %16 = vector.broadcast %11 : vector<1x64xf32> to vector<128x64xf32>
    %17 = arith.addf %15, %16 : vector<128x64xf32>
    %cst_11 = arith.constant 0.000000e+00 : f32
    %18 = vector.broadcast %cst_11 : f32 to vector<128x64xf32>
    %19 = arith.maximumf %17, %18 : vector<128x64xf32>
    %20 = arith.truncf %19 : vector<128x64xf32> to vector<128x64xbf16>
    %cst_12 = arith.constant dense<0.000000e+00> : vector<128x8xf32>
    %21 = tpu.matmul %20, %10, %cst_12 {dimension_numbers = #tpu.dot_dimension_numbers<[1], [0], [0], [1], [0, 0, 1, 1], [], []>} : vector<128x64xbf16>, vector<64x8xbf16>, vector<128x8xf32> -> vector<128x8xf32>
    %22 = vector.broadcast %12 : vector<1x8xf32> to vector<128x8xf32>
    %23 = arith.addf %21, %22 : vector<128x8xf32>
    %c0_13 = arith.constant 0 : index
    %c0_14 = arith.constant 0 : index
    %24 = vector.load %arg4[%c0_13, %c0_14] : memref<128x8xf32, #tpu.memory_space<vmem>>, vector<128x8xf32>
    tpu.vector_store %arg4[%c0_13, %c0_14], %23 {strides = array<i32>} : memref<128x8xf32, #tpu.memory_space<vmem>>, vector<128x8xf32>,
    return
  }
  func.func @transform_0(%arg0: i32) -> (i32, i32) {
    %c0_i32 = arith.constant 0 : i32
    %c0_i32_0 = arith.constant 0 : i32
    return %arg0, %c0_i32 : i32, i32
  }
  func.func @transform_1(%arg0: i32) -> (i32, i32) {
    %c0_i32 = arith.constant 0 : i32
    %c0_i32_0 = arith.constant 0 : i32
    %c0_i32_1 = arith.constant 0 : i32
    return %c0_i32, %c0_i32_0 : i32, i32
  }
  func.func @transform_2(%arg0: i32) -> (i32, i32) {
    %c0_i32 = arith.constant 0 : i32
    %c0_i32_0 = arith.constant 0 : i32
    %c0_i32_1 = arith.constant 0 : i32
    return %c0_i32, %c0_i32_0 : i32, i32
  }
  func.func @transform_3(%arg0: i32) -> (i32, i32) {
    %c0_i32 = arith.constant 0 : i32
    %c0_i32_0 = arith.constant 0 : i32
    return %arg0, %c0_i32 : i32, i32
  }
}

</mosaic_0001>

<llo_original>
// kernel: tpu_custom_call.1
$region0: #{tpu_custom_call.1}
  #allocation0 [shape = 'u32[]', space=smem, size = 0x4, offset = 0x4, fixed_abs, tag = 'smem constant byte address 0x4 - core index']
  #allocation1 [shape = 'u32[72,128]{1,0:T(1,128)}', space=vmem, size = 0x9000, scoped, tag = 'internal scratch']
  %s0 = inlined_call_operand.vmem [shape: s32[256,1], index: 0, kind: input, shape index: {}]
  %s1 = inlined_call_operand.vmem [shape: bf16[144,128], index: 1, kind: input, shape index: {}]
  %s2 = inlined_call_operand.vmem [shape: f32[8,128], index: 2, kind: input, shape index: {}]
  %s3 = inlined_call_operand.vmem [shape: f32[256,8], index: 3, kind: output, shape index: {}]
  %s4 = sld [smem:[#allocation0]]
  $region45: #{tpu_custom_call.1} parent=0
    _
  %s6 = ssub.s32 1, %s4
  %s7 = scalar_select 0, %s6, %s4
  loop: start=0, step=1, limit=4
  $region2: #{tpu_custom_call.1} parent=0 // loop_pre_header
    _
  $region3: #{tpu_custom_call.1} parent=0 // loop_header
    %s9 = sphi 0, %s13
    %p10 = scmp.ge.s32.totalorder %s9, 4
    %s19 = sphi 0, %s21
    %s22 = sphi 0, %s19
    %s23 = sphi 0, %s22
    %s39 = sphi 0, %s23
    %s43 = sphi 0, %s43
    %s45 = sphi 0, %s43
    %s46 = sphi 0, %s45
    %s60 = sphi 0, %s46
    %s64 = sphi 0, %s64
    %s66 = sphi 0, %s64
    %s67 = sphi 0, %s66
    %s81 = sphi 0, %s67
    %s87 = sphi 0, %s89
    %s90 = sphi 0, %s87
    %s91 = sphi 0, %s90
    %s107 = sphi 0, %s91
  $region4: #{tpu_custom_call.1} parent=0 // loop_header_branch
    %12 = sbr.rel (%p10) target = $region8
  $region5: #{tpu_custom_call.1} parent=0 // loop_body
    %s14 = ssub.s32 %s9, 1
    %s15 = ssub.s32 %s9, 2
    %s16 = sadd.s32 %s9, 1
    %s17 = ssub.s32 %s9, %s16
    %p18 = scmp.eq.s32.totalorder %s17, 0
    %s20 = sadd.s32 %s19, 1
    %s21 = scalar_select %p18, %s19, %s20
    %p24 = pneg %p18
    %p25 = scmp.eq.s32.totalorder %s9, 1
    %p26 = por %p24, %p25
    %p27 = scmp.ne.s32.totalorder %s19, %s22
    %p28 = scmp.eq.s32.totalorder %s9, 0
    %p29 = por %p27, %p28
    %p30 = scmp.ne.s32.totalorder %s19, %s22
    %p31 = scmp.eq.s32.totalorder %s14, 1
    %p32 = por %p30, %p31
    %p33 = scmp.ne.s32.totalorder %s22, %s23
    %p34 = scmp.eq.s32.totalorder %s14, 0
    %p35 = por %p33, %p34
    %p36 = scmp.ne.s32.totalorder %s22, %s23
    %p37 = scmp.eq.s32.totalorder %s15, 1
    %p38 = por %p36, %p37
    %p40 = scmp.ne.s32.totalorder %s23, %s39
    %p41 = scmp.eq.s32.totalorder %s15, 0
    %p42 = por %p40, %p41
    %s44 = sadd.s32 %s43, 1
    %p47 = scmp.eq.s32.totalorder %s9, 1
    %p48 = scmp.ne.s32.totalorder %s43, %s45
    %p49 = scmp.eq.s32.totalorder %s9, 0
    %p50 = por %p48, %p49
    %p51 = scmp.ne.s32.totalorder %s43, %s45
    %p52 = scmp.eq.s32.totalorder %s14, 1
    %p53 = por %p51, %p52
    %p54 = scmp.ne.s32.totalorder %s45, %s46
    %p55 = scmp.eq.s32.totalorder %s14, 0
    %p56 = por %p54, %p55
    %p57 = scmp.ne.s32.totalorder %s45, %s46
    %p58 = scmp.eq.s32.totalorder %s15, 1
    %p59 = por %p57, %p58
    %p61 = scmp.ne.s32.totalorder %s46, %s60
    %p62 = scmp.eq.s32.totalorder %s15, 0
    %p63 = por %p61, %p62
    %s65 = sadd.s32 %s64, 1
    %p68 = scmp.eq.s32.totalorder %s9, 1
    %p69 = scmp.ne.s32.totalorder %s64, %s66
    %p70 = scmp.eq.s32.totalorder %s9, 0
    %p71 = por %p69, %p70
    %p72 = scmp.ne.s32.totalorder %s64, %s66
    %p73 = scmp.eq.s32.totalorder %s14, 1
    %p74 = por %p72, %p73
    %p75 = scmp.ne.s32.totalorder %s66, %s67
    %p76 = scmp.eq.s32.totalorder %s14, 0
    %p77 = por %p75, %p76
    %p78 = scmp.ne.s32.totalorder %s66, %s67
    %p79 = scmp.eq.s32.totalorder %s15, 1
    %p80 = por %p78, %p79
    %p82 = scmp.ne.s32.totalorder %s67, %s81
    %p83 = scmp.eq.s32.totalorder %s15, 0
    %p84 = por %p82, %p83
    %s85 = ssub.s32 %s9, %s16
    %p86 = scmp.eq.s32.totalorder %s85, 0
    %s88 = sadd.s32 %s87, 1
    %s89 = scalar_select %p86, %s87, %s88
    %p92 = pneg %p86
    %p93 = scmp.eq.s32.totalorder %s9, 1
    %p94 = por %p92, %p93
    %p95 = scmp.ne.s32.totalorder %s87, %s90
    %p96 = scmp.eq.s32.totalorder %s9, 0
    %p97 = por %p95, %p96
    %p98 = scmp.ne.s32.totalorder %s87, %s90
    %p99 = scmp.eq.s32.totalorder %s14, 1
    %p100 = por %p98, %p99
    %p101 = scmp.ne.s32.totalorder %s90, %s91
    %p102 = scmp.eq.s32.totalorder %s14, 0
    %p103 = por %p101, %p102
    %p104 = scmp.ne.s32.totalorder %s90, %s91
    %p105 = scmp.eq.s32.totalorder %s15, 1
    %p106 = por %p104, %p105
    %p108 = scmp.ne.s32.totalorder %s91, %s107
    %p109 = scmp.eq.s32.totalorder %s15, 0
    %p110 = por %p108, %p109
    %p111 = scmp.le.s32.totalorder 1, %s9
    %p112 = scmp.lt.s32.totalorder %s9, 3
    %p113 = pnand %p111, %p112
    %p114 = pneg %p113
    // Predicated region
    $region9: #{tpu_custom_call.1} parent=5 // pred_check
      _
    $region10: #{tpu_custom_call.1} parent=5 // pred_check_branch
      %116 = sbr.rel (%p113) target = $region12
    $region11: #{tpu_custom_call.1} parent=5 // pred_region
      %s117 = ssub.s32 %s9, 1
      // Predicated region
      $region13: #{tpu_custom_call.1} parent=11 // pred_check
        %p118 = pneg %p56
      $region14: #{tpu_custom_call.1} parent=11 // pred_check_branch
        %120 = sbr.rel (%p118) target = $region16
      $region15: #{tpu_custom_call.1} parent=11 // pred_region
        _
      $region16: #{tpu_custom_call.1} parent=11 // pred_fallthru
        _
      // Predicated region
      $region17: #{tpu_custom_call.1} parent=11 // pred_check
        %p121 = pneg %p77
      $region18: #{tpu_custom_call.1} parent=11 // pred_check_branch
        %123 = sbr.rel (%p121) target = $region20
      $region19: #{tpu_custom_call.1} parent=11 // pred_region
        _
      $region20: #{tpu_custom_call.1} parent=11 // pred_fallthru
        _
    $region12: #{tpu_custom_call.1} parent=5 // pred_fallthru
      _
    %p124 = scmp.lt.s32.totalorder %s9, 2
    // Predicated region
    $region21: #{tpu_custom_call.1} parent=5 // pred_check
      %p125 = pneg %p124
    $region22: #{tpu_custom_call.1} parent=5 // pred_check_branch
      %127 = sbr.rel (%p125) target = $region24
    $region23: #{tpu_custom_call.1} parent=5 // pred_region
      // Predicated region
      $region25: #{tpu_custom_call.1} parent=23 // pred_check
        %p128 = pneg %p29
      $region26: #{tpu_custom_call.1} parent=23 // pred_check_branch
        %130 = sbr.rel (%p128) target = $region28
      $region27: #{tpu_custom_call.1} parent=23 // pred_region
        %s131 = smul.u32 16, %s9
        %p132 = scmp.lt.s32.totalorder %s131, 31
        %s133 = scalar_select %p132, %s131, 31
        %s134 = smul.addr %s133, 8
        %s135 = scalar_lea.vmem %s0, %s134
        %s136 = smul.u32 16, %s9
      $region28: #{tpu_custom_call.1} parent=23 // pred_fallthru
        _
    $region24: #{tpu_custom_call.1} parent=5 // pred_fallthru
      _
    %p137 = scmp.le.s32.totalorder 1, %s9
    %p138 = scmp.lt.s32.totalorder %s9, 3
    %p139 = pnand %p137, %p138
    %p140 = pneg %p139
    // Predicated region
    $region29: #{tpu_custom_call.1} parent=5 // pred_check
      _
    $region30: #{tpu_custom_call.1} parent=5 // pred_check_branch
      %142 = sbr.rel (%p139) target = $region32
    $region31: #{tpu_custom_call.1} parent=5 // pred_region
      %s143 = ssub.s32 %s9, 1
      %s144 = smul.u32 16, %s14
      %p145 = scmp.lt.s32.totalorder %s144, 31
      %s146 = scalar_select %p145, %s144, 31
      %s147 = smul.addr %s146, 8
      %s148 = scalar_lea.vmem %s0, %s147
      %p149 = pneg %p35
      %p150 = pneg %p32
      %p151 = pneg %p56
      %p152 = pneg %p53
      %p153 = pneg %p77
      %p154 = pneg %p74
      %p155 = pneg %p103
      %p156 = pneg %p100
      %s157 = smul.u32 16, %s14
      %p158 = scmp.lt.s32.totalorder %s157, 31
      %s159 = scalar_select %p158, %s157, 31
      %s160 = smul.addr %s159, 8
      %s161 = scalar_lea.vmem %s3, %s160
      %s162 = smul.u32 16, %s14
      %p163 = scmp.lt.s32.totalorder %s162, 31
      %s164 = scalar_select %p163, %s162, 31
      %s165 = smul.addr %s164, 8
      %s166 = scalar_lea.vmem %s0, %s165
      %s167 = smul.u32 16, %s14
      %s168 = smul.u32 16, %s14
      %p169 = scmp.lt.s32.totalorder %s168, 31
      %s170 = scalar_select %p169, %s168, 31
      %s171 = smul.addr %s170, 8
      %s172 = scalar_lea.vmem %s3, %s171
      %s173 = smul.u32 16, %s14
      %v175 = vld [vmem:[%s166] sm:$0xff]
      %v176 = vld [vmem:[%s166 + $0x8] sm:$0xff]
      %v177 = vld [vmem:[%s166 + $0x10] sm:$0xff]
      %v178 = vld [vmem:[%s166 + $0x18] sm:$0xff]
      %v179 = vld [vmem:[%s166 + $0x20] sm:$0xff]
      %v180 = vld [vmem:[%s166 + $0x28] sm:$0xff]
      %v181 = vld [vmem:[%s166 + $0x30] sm:$0xff]
      %v182 = vld [vmem:[%s166 + $0x38] sm:$0xff]
      %v183 = vld [vmem:[%s166 + $0x40] sm:$0xff]
      %v184 = vld [vmem:[%s166 + $0x48] sm:$0xff]
      %v185 = vld [vmem:[%s166 + $0x50] sm:$0xff]
      %v186 = vld [vmem:[%s166 + $0x58] sm:$0xff]
      %v187 = vld [vmem:[%s166 + $0x60] sm:$0xff]
      %v188 = vld [vmem:[%s166 + $0x68] sm:$0xff]
      %v189 = vld [vmem:[%s166 + $0x70] sm:$0xff]
      %v190 = vld [vmem:[%s166 + $0x78] sm:$0xff]
      %v191 = vlaneseq
      %v192 = vand.u32 %v191, 127
      %193 = vset.pattern.permute.xlu0 0
      %194 = vperm.xlu0 %193, %v175
      %v195 = vpop.permute.xlu0 %194
      %196 = vset.pattern.permute.xlu0 0
      %197 = vperm.xlu0 %196, %v176
      %v198 = vpop.permute.xlu0 %197
      %199 = vset.pattern.permute.xlu0 0
      %200 = vperm.xlu0 %199, %v177
      %v201 = vpop.permute.xlu0 %200
      %202 = vset.pattern.permute.xlu0 0
      %203 = vperm.xlu0 %202, %v178
      %v204 = vpop.permute.xlu0 %203
      %205 = vset.pattern.permute.xlu0 0
      %206 = vperm.xlu0 %205, %v179
      %v207 = vpop.permute.xlu0 %206
      %208 = vset.pattern.permute.xlu0 0
      %209 = vperm.xlu0 %208, %v180
      %v210 = vpop.permute.xlu0 %209
      %211 = vset.pattern.permute.xlu0 0
      %212 = vperm.xlu0 %211, %v181
      %v213 = vpop.permute.xlu0 %212
      %214 = vset.pattern.permute.xlu0 0
      %215 = vperm.xlu0 %214, %v182
      %v216 = vpop.permute.xlu0 %215
      %217 = vset.pattern.permute.xlu0 0
      %218 = vperm.xlu0 %217, %v183
      %v219 = vpop.permute.xlu0 %218
      %220 = vset.pattern.permute.xlu0 0
      %221 = vperm.xlu0 %220, %v184
      %v222 = vpop.permute.xlu0 %221
      %223 = vset.pattern.permute.xlu0 0
      %224 = vperm.xlu0 %223, %v185
      %v225 = vpop.permute.xlu0 %224
      %226 = vset.pattern.permute.xlu0 0
      %227 = vperm.xlu0 %226, %v186
      %v228 = vpop.permute.xlu0 %227
      %229 = vset.pattern.permute.xlu0 0
      %230 = vperm.xlu0 %229, %v187
      %v231 = vpop.permute.xlu0 %230
      %232 = vset.pattern.permute.xlu0 0
      %233 = vperm.xlu0 %232, %v188
      %v234 = vpop.permute.xlu0 %233
      %235 = vset.pattern.permute.xlu0 0
      %236 = vperm.xlu0 %235, %v189
      %v237 = vpop.permute.xlu0 %236
      %238 = vset.pattern.permute.xlu0 0
      %239 = vperm.xlu0 %238, %v190
      %v240 = vpop.permute.xlu0 %239
      %vm241 = vcmp.eq.s32.totalorder %v192, %v195
      %vm242 = vcmp.eq.s32.totalorder %v192, %v198
      %vm243 = vcmp.eq.s32.totalorder %v192, %v201
      %vm244 = vcmp.eq.s32.totalorder %v192, %v204
      %vm245 = vcmp.eq.s32.totalorder %v192, %v207
      %vm246 = vcmp.eq.s32.totalorder %v192, %v210
      %vm247 = vcmp.eq.s32.totalorder %v192, %v213
      %vm248 = vcmp.eq.s32.totalorder %v192, %v216
      %vm249 = vcmp.eq.s32.totalorder %v192, %v219
      %vm250 = vcmp.eq.s32.totalorder %v192, %v222
      %vm251 = vcmp.eq.s32.totalorder %v192, %v225
      %vm252 = vcmp.eq.s32.totalorder %v192, %v228
      %vm253 = vcmp.eq.s32.totalorder %v192, %v231
      %vm254 = vcmp.eq.s32.totalorder %v192, %v234
      %vm255 = vcmp.eq.s32.totalorder %v192, %v237
      %vm256 = vcmp.eq.s32.totalorder %v192, %v240
      %v257 = vsel %vm241, 1.0, 0.0
      %v258 = vsel %vm242, 1.0, 0.0
      %v259 = vsel %vm243, 1.0, 0.0
      %v260 = vsel %vm244, 1.0, 0.0
      %v261 = vsel %vm245, 1.0, 0.0
      %v262 = vsel %vm246, 1.0, 0.0
      %v263 = vsel %vm247, 1.0, 0.0
      %v264 = vsel %vm248, 1.0, 0.0
      %v265 = vsel %vm249, 1.0, 0.0
      %v266 = vsel %vm250, 1.0, 0.0
      %v267 = vsel %vm251, 1.0, 0.0
      %v268 = vsel %vm252, 1.0, 0.0
      %v269 = vsel %vm253, 1.0, 0.0
      %v270 = vsel %vm254, 1.0, 0.0
      %v271 = vsel %vm255, 1.0, 0.0
      %v272 = vsel %vm256, 1.0, 0.0
      %v273 = vpack.c.bf16 %v258, %v257
      %v274 = vpack.c.bf16 %v260, %v259
      %v275 = vpack.c.bf16 %v262, %v261
      %v276 = vpack.c.bf16 %v264, %v263
      %v277 = vpack.c.bf16 %v266, %v265
      %v278 = vpack.c.bf16 %v268, %v267
      %v279 = vpack.c.bf16 %v270, %v269
      %v280 = vpack.c.bf16 %v272, %v271
      %v281 = vld [vmem:[%s1] sm:$0xf]
      %v282 = vld [vmem:[%s1 + $0x4] sm:$0xf]
      %v283 = vld [vmem:[%s1 + $0x8] sm:$0xf]
      %v284 = vld [vmem:[%s1 + $0xc] sm:$0xf]
      %v285 = vld [vmem:[%s1 + $0x10] sm:$0xf]
      %v286 = vld [vmem:[%s1 + $0x14] sm:$0xf]
      %v287 = vld [vmem:[%s1 + $0x18] sm:$0xf]
      %v288 = vld [vmem:[%s1 + $0x1c] sm:$0xf]
      %v289 = vld [vmem:[%s1 + $0x20] sm:$0xf]
      %v290 = vld [vmem:[%s1 + $0x24] sm:$0xf]
      %v291 = vld [vmem:[%s1 + $0x28] sm:$0xf]
      %v292 = vld [vmem:[%s1 + $0x2c] sm:$0xf]
      %v293 = vld [vmem:[%s1 + $0x30] sm:$0xf]
      %v294 = vld [vmem:[%s1 + $0x34] sm:$0xf]
      %v295 = vld [vmem:[%s1 + $0x38] sm:$0xf]
      %v296 = vld [vmem:[%s1 + $0x3c] sm:$0xf]
      %v297 = vld [vmem:[%s1 + $0x40] sm:$0xf]
      %v298 = vld [vmem:[%s1 + $0x44] sm:$0xf]
      %v299 = vld [vmem:[%s2] sm:$0x1]
      %v300 = vld [vmem:[%s2 + $0x1] sm:$0x1]
      %v303 = vunpack.c.l.b16 %v281
      %v304 = vunpack.c.l.b16 %v282
      %v305 = vpack.c.b16 %v304, %v303
      %vm307 = vcmask 130048
      %v309 = vsel %vm307, %v273, 0
      %v312 = vsel %vm307, %v274, 0
      %v315 = vsel %vm307, %v275, 0
      %v318 = vsel %vm307, %v276, 0
      %v321 = vsel %vm307, %v277, 0
      %v324 = vsel %vm307, %v278, 0
      %v327 = vsel %vm307, %v279, 0
      %v330 = vsel %vm307, %v280, 0
      %332 = vmatpush.bf16.msra.mxu0 0
      %333 = vmatpush.bf16.msra.mxu0 0
      %334 = vmatpush.bf16.msra.mxu0 0
      %335 = vmatpush.bf16.msra.mxu0 0
      %336 = vmatpush.bf16.msra.mxu0 0
      %337 = vmatpush.bf16.msra.mxu0 0
      %338 = vmatpush.bf16.msra.mxu0 0
      %339 = vmatpush.bf16.msra.mxu0 %v305
      %340 = vmatmul.bf16.gmra.mxu0 %v309
      %v341 = vpop.f32.mrf.mxu0
      %v342 = vadd.f32 0.0, %v341
      %v343 = vpop.f32.mrf.mxu0
      %v344 = vadd.f32 0.0, %v343
      %345 = vmatmul.bf16.gmra.mxu0 %v312
      %v346 = vpop.f32.mrf.mxu0
      %v347 = vadd.f32 0.0, %v346
      %v348 = vpop.f32.mrf.mxu0
      %v349 = vadd.f32 0.0, %v348
      %350 = vmatmul.bf16.gmra.mxu0 %v315
      %v351 = vpop.f32.mrf.mxu0
      %v352 = vadd.f32 0.0, %v351
      %v353 = vpop.f32.mrf.mxu0
      %v354 = vadd.f32 0.0, %v353
      %355 = vmatmul.bf16.gmra.mxu0 %v318
      %v356 = vpop.f32.mrf.mxu0
      %v357 = vadd.f32 0.0, %v356
      %v358 = vpop.f32.mrf.mxu0
      %v359 = vadd.f32 0.0, %v358
      %360 = vmatmul.bf16.gmra.mxu0 %v321
      %v361 = vpop.f32.mrf.mxu0
      %v362 = vadd.f32 0.0, %v361
      %v363 = vpop.f32.mrf.mxu0
      %v364 = vadd.f32 0.0, %v363
      %365 = vmatmul.bf16.gmra.mxu0 %v324
      %v366 = vpop.f32.mrf.mxu0
      %v367 = vadd.f32 0.0, %v366
      %v368 = vpop.f32.mrf.mxu0
      %v369 = vadd.f32 0.0, %v368
      %370 = vmatmul.bf16.gmra.mxu0 %v327
      %v371 = vpop.f32.mrf.mxu0
      %v372 = vadd.f32 0.0, %v371
      %v373 = vpop.f32.mrf.mxu0
      %v374 = vadd.f32 0.0, %v373
      %375 = vmatmul.bf16.gmra.mxu0 %v330
      %v376 = vpop.f32.mrf.mxu0
      %v377 = vadd.f32 0.0, %v376
      %v378 = vpop.f32.mrf.mxu0
      %v379 = vadd.f32 0.0, %v378
      %380 = vdwg.mxu0
      %v381 = vpack.c.bf16 %v344, %v342
      %v382 = vpack.c.bf16 %v349, %v347
      %v383 = vpack.c.bf16 %v354, %v352
      %v384 = vpack.c.bf16 %v359, %v357
      %v385 = vpack.c.bf16 %v364, %v362
      %v386 = vpack.c.bf16 %v369, %v367
      %v387 = vpack.c.bf16 %v374, %v372
      %v388 = vpack.c.bf16 %v379, %v377
      %v389 = vperm.slane %v299, 0
      %v398 = vunpack.c.l.b16 %v283
      %v399 = vunpack.c.l.b16 %v284
      %v400 = vunpack.c.l.b16 %v285
      %v401 = vunpack.c.l.b16 %v286
      %v402 = vunpack.c.l.b16 %v287
      %v403 = vunpack.c.l.b16 %v288
      %v404 = vunpack.c.l.b16 %v289
      %v405 = vunpack.c.l.b16 %v290
      %v406 = vpack.c.b16 %v399, %v398
      %v407 = vpack.c.b16 %v401, %v400
      %v408 = vpack.c.b16 %v403, %v402
      %v409 = vpack.c.b16 %v405, %v404
      %vm414 = vcmask 523264
      %v416 = vsel %vm414, %v381, 0
      %v419 = vsel %vm414, %v382, 0
      %v422 = vsel %vm414, %v383, 0
      %v425 = vsel %vm414, %v384, 0
      %v428 = vsel %vm414, %v385, 0
      %v431 = vsel %vm414, %v386, 0
      %v434 = vsel %vm414, %v387, 0
      %v437 = vsel %vm414, %v388, 0
      %439 = vmatpush.bf16.msra.mxu0 0
      %440 = vmatpush.bf16.msra.mxu0 0
      %441 = vmatpush.bf16.msra.mxu0 0
      %442 = vmatpush.bf16.msra.mxu0 0
      %443 = vmatpush.bf16.msra.mxu0 %v409
      %444 = vmatpush.bf16.msra.mxu0 %v408
      %445 = vmatpush.bf16.msra.mxu0 %v407
      %446 = vmatpush.bf16.msra.mxu0 %v406
      %447 = vmatmul.bf16.gmra.mxu0 %v416
      %v448 = vpop.f32.mrf.mxu0
      %v449 = vadd.f32 %v389, %v448
      %v450 = vpop.f32.mrf.mxu0
      %v451 = vadd.f32 %v389, %v450
      %452 = vmatmul.bf16.gmra.mxu0 %v419
      %v453 = vpop.f32.mrf.mxu0
      %v454 = vadd.f32 %v389, %v453
      %v455 = vpop.f32.mrf.mxu0
      %v456 = vadd.f32 %v389, %v455
      %457 = vmatmul.bf16.gmra.mxu0 %v422
      %v458 = vpop.f32.mrf.mxu0
      %v459 = vadd.f32 %v389, %v458
      %v460 = vpop.f32.mrf.mxu0
      %v461 = vadd.f32 %v389, %v460
      %462 = vmatmul.bf16.gmra.mxu0 %v425
      %v463 = vpop.f32.mrf.mxu0
      %v464 = vadd.f32 %v389, %v463
      %v465 = vpop.f32.mrf.mxu0
      %v466 = vadd.f32 %v389, %v465
      %467 = vmatmul.bf16.gmra.mxu0 %v428
      %v468 = vpop.f32.mrf.mxu0
      %v469 = vadd.f32 %v389, %v468
      %v470 = vpop.f32.mrf.mxu0
      %v471 = vadd.f32 %v389, %v470
      %472 = vmatmul.bf16.gmra.mxu0 %v431
      %v473 = vpop.f32.mrf.mxu0
      %v474 = vadd.f32 %v389, %v473
      %v475 = vpop.f32.mrf.mxu0
      %v476 = vadd.f32 %v389, %v475
      %477 = vmatmul.bf16.gmra.mxu0 %v434
      %v478 = vpop.f32.mrf.mxu0
      %v479 = vadd.f32 %v389, %v478
      %v480 = vpop.f32.mrf.mxu0
      %v481 = vadd.f32 %v389, %v480
      %482 = vmatmul.bf16.gmra.mxu0 %v437
      %v483 = vpop.f32.mrf.mxu0
      %v484 = vadd.f32 %v389, %v483
      %v485 = vpop.f32.mrf.mxu0
      %v486 = vadd.f32 %v389, %v485
      %487 = vdwg.mxu0
      %v488 = vmax.f32 %v449, 0.0
      %v489 = vmax.f32 %v451, 0.0
      %v490 = vmax.f32 %v454, 0.0
      %v491 = vmax.f32 %v456, 0.0
      %v492 = vmax.f32 %v459, 0.0
      %v493 = vmax.f32 %v461, 0.0
      %v494 = vmax.f32 %v464, 0.0
      %v495 = vmax.f32 %v466, 0.0
      %v496 = vmax.f32 %v469, 0.0
      %v497 = vmax.f32 %v471, 0.0
      %v498 = vmax.f32 %v474, 0.0
      %v499 = vmax.f32 %v476, 0.0
      %v500 = vmax.f32 %v479, 0.0
      %v501 = vmax.f32 %v481, 0.0
      %v502 = vmax.f32 %v484, 0.0
      %v503 = vmax.f32 %v486, 0.0
      %v504 = vpack.c.bf16 %v489, %v488
      %v505 = vpack.c.bf16 %v491, %v490
      %v506 = vpack.c.bf16 %v493, %v492
      %v507 = vpack.c.bf16 %v495, %v494
      %v508 = vpack.c.bf16 %v497, %v496
      %v509 = vpack.c.bf16 %v499, %v498
      %v510 = vpack.c.bf16 %v501, %v500
      %v511 = vpack.c.bf16 %v503, %v502
      %v512 = vperm.slane %v300, 0
      %v521 = vunpack.c.l.b16 %v291
      %v522 = vunpack.c.l.b16 %v292
      %v523 = vunpack.c.l.b16 %v293
      %v524 = vunpack.c.l.b16 %v294
      %v525 = vunpack.c.l.b16 %v295
      %v526 = vunpack.c.l.b16 %v296
      %v527 = vunpack.c.l.b16 %v297
      %v528 = vunpack.c.l.b16 %v298
      %v529 = vpack.c.b16 %v522, %v521
      %v530 = vpack.c.b16 %v524, %v523
      %v531 = vpack.c.b16 %v526, %v525
      %v532 = vpack.c.b16 %v528, %v527
      %v538 = vsel %vm414, %v504, 0
      %v541 = vsel %vm414, %v505, 0
      %v544 = vsel %vm414, %v506, 0
      %v547 = vsel %vm414, %v507, 0
      %v550 = vsel %vm414, %v508, 0
      %v553 = vsel %vm414, %v509, 0
      %v556 = vsel %vm414, %v510, 0
      %v559 = vsel %vm414, %v511, 0
      %561 = vmatpush.bf16.msra.mxu0 0
      %562 = vmatpush.bf16.msra.mxu0 0
      %563 = vmatpush.bf16.msra.mxu0 0
      %564 = vmatpush.bf16.msra.mxu0 0
      %565 = vmatpush.bf16.msra.mxu0 %v532
      %566 = vmatpush.bf16.msra.mxu0 %v531
      %567 = vmatpush.bf16.msra.mxu0 %v530
      %568 = vmatpush.bf16.msra.mxu0 %v529
      %569 = vmatmul.bf16.gmra.mxu0 %v538
      %v570 = vpop.f32.mrf.mxu0
      %v571 = vadd.f32 %v512, %v570
      %v572 = vpop.f32.mrf.mxu0
      %v573 = vadd.f32 %v512, %v572
      %574 = vmatmul.bf16.gmra.mxu0 %v541
      %v575 = vpop.f32.mrf.mxu0
      %v576 = vadd.f32 %v512, %v575
      %v577 = vpop.f32.mrf.mxu0
      %v578 = vadd.f32 %v512, %v577
      %579 = vmatmul.bf16.gmra.mxu0 %v544
      %v580 = vpop.f32.mrf.mxu0
      %v581 = vadd.f32 %v512, %v580
      %v582 = vpop.f32.mrf.mxu0
      %v583 = vadd.f32 %v512, %v582
      %584 = vmatmul.bf16.gmra.mxu0 %v547
      %v585 = vpop.f32.mrf.mxu0
      %v586 = vadd.f32 %v512, %v585
      %v587 = vpop.f32.mrf.mxu0
      %v588 = vadd.f32 %v512, %v587
      %589 = vmatmul.bf16.gmra.mxu0 %v550
      %v590 = vpop.f32.mrf.mxu0
      %v591 = vadd.f32 %v512, %v590
      %v592 = vpop.f32.mrf.mxu0
      %v593 = vadd.f32 %v512, %v592
      %594 = vmatmul.bf16.gmra.mxu0 %v553
      %v595 = vpop.f32.mrf.mxu0
      %v596 = vadd.f32 %v512, %v595
      %v597 = vpop.f32.mrf.mxu0
      %v598 = vadd.f32 %v512, %v597
      %599 = vmatmul.bf16.gmra.mxu0 %v556
      %v600 = vpop.f32.mrf.mxu0
      %v601 = vadd.f32 %v512, %v600
      %v602 = vpop.f32.mrf.mxu0
      %v603 = vadd.f32 %v512, %v602
      %604 = vmatmul.bf16.gmra.mxu0 %v559
      %v605 = vpop.f32.mrf.mxu0
      %v606 = vadd.f32 %v512, %v605
      %v607 = vpop.f32.mrf.mxu0
      %v608 = vadd.f32 %v512, %v607
      %609 = vdwg.mxu0
      %vm610 = vcmask 64512
      %611 = vst.msk [vmem:[%s172] sm:$0xff] %vm610, %v571
      %612 = vst.msk [vmem:[%s172 + $0x8] sm:$0xff] %vm610, %v573
      %613 = vst.msk [vmem:[%s172 + $0x10] sm:$0xff] %vm610, %v576
      %614 = vst.msk [vmem:[%s172 + $0x18] sm:$0xff] %vm610, %v578
      %615 = vst.msk [vmem:[%s172 + $0x20] sm:$0xff] %vm610, %v581
      %616 = vst.msk [vmem:[%s172 + $0x28] sm:$0xff] %vm610, %v583
      %617 = vst.msk [vmem:[%s172 + $0x30] sm:$0xff] %vm610, %v586
      %618 = vst.msk [vmem:[%s172 + $0x38] sm:$0xff] %vm610, %v588
      %619 = vst.msk [vmem:[%s172 + $0x40] sm:$0xff] %vm610, %v591
      %620 = vst.msk [vmem:[%s172 + $0x48] sm:$0xff] %vm610, %v593
      %621 = vst.msk [vmem:[%s172 + $0x50] sm:$0xff] %vm610, %v596
      %622 = vst.msk [vmem:[%s172 + $0x58] sm:$0xff] %vm610, %v598
      %623 = vst.msk [vmem:[%s172 + $0x60] sm:$0xff] %vm610, %v601
      %624 = vst.msk [vmem:[%s172 + $0x68] sm:$0xff] %vm610, %v603
      %625 = vst.msk [vmem:[%s172 + $0x70] sm:$0xff] %vm610, %v606
      %626 = vst.msk [vmem:[%s172 + $0x78] sm:$0xff] %vm610, %v608
      %s627 = smul.u32 16, %s14
      %p628 = scmp.lt.s32.totalorder %s627, 31
      %s629 = scalar_select %p628, %s627, 31
      %s630 = smul.addr %s629, 8
      %s631 = scalar_lea.vmem %s3, %s630
      // Predicated region
      $region33: #{tpu_custom_call.1} parent=31 // pred_check
        %p632 = pneg %p100
      $region34: #{tpu_custom_call.1} parent=31 // pred_check_branch
        %634 = sbr.rel (%p632) target = $region36
      $region35: #{tpu_custom_call.1} parent=31 // pred_region
        %s635 = smul.u32 16, %s14
      $region36: #{tpu_custom_call.1} parent=31 // pred_fallthru
        _
    $region32: #{tpu_custom_call.1} parent=5 // pred_fallthru
      _
    %p636 = scmp.le.s32.totalorder 2, %s9
    // Predicated region
    $region37: #{tpu_custom_call.1} parent=5 // pred_check
      %p637 = pneg %p636
    $region38: #{tpu_custom_call.1} parent=5 // pred_check_branch
      %639 = sbr.rel (%p637) target = $region40
    $region39: #{tpu_custom_call.1} parent=5 // pred_region
      %s640 = ssub.s32 %s9, 2
      // Predicated region
      $region41: #{tpu_custom_call.1} parent=39 // pred_check
        %p641 = pneg %p106
      $region42: #{tpu_custom_call.1} parent=39 // pred_check_branch
        %643 = sbr.rel (%p641) target = $region44
      $region43: #{tpu_custom_call.1} parent=39 // pred_region
        %s644 = smul.u32 16, %s15
        %p645 = scmp.lt.s32.totalorder %s644, 31
        %s646 = scalar_select %p645, %s644, 31
        %s647 = smul.addr %s646, 8
        %s648 = scalar_lea.vmem %s3, %s647
      $region44: #{tpu_custom_call.1} parent=39 // pred_fallthru
        _
    $region40: #{tpu_custom_call.1} parent=5 // pred_fallthru
      _
  $region6: #{tpu_custom_call.1} parent=0 // loop_footer
    %s13 = sadd.s32 1, %s9
  $region7: #{tpu_custom_call.1} parent=0 // loop_footer_branch
    %8 = sbr.rel target = $region3
  $region8: #{tpu_custom_call.1} parent=0 // loop_exit
    _

</llo_original>
